<compile_context>
chip_gen: v7x
topology: tpu7x:2x2x1
jax: 0.10.0
libtpu: 0.0.40
codegen_flags: <defaults>
</compile_context>

<pallas_src>
import jax
import jax.numpy as jnp
import numpy as np
from jax.experimental import pallas as pl
from jax.experimental.pallas import tpu as pltpu


# ---------------------------------------------------------------------------
# Kernel 1: one-shot, batch-invariant projection
#   pe[c, s] = sum_k w[c, k] * pos[k, s] + b[c]     (4 VPU broadcast FMAs)
# ---------------------------------------------------------------------------
def _project_pos_kernel(pos_ref, w_ref, b_ref, pe_ref):
    # pos_ref: (4, S), w_ref: (C, 4), b_ref: (C, 1), pe_ref: (C, S)
    pos = pos_ref[...]
    w = w_ref[...]
    pe = b_ref[...]                                    # (C, 1) -> broadcasts to (C, S)
    for k in range(4):                                 # VPU FMAs, no MXU push
        pe = pe + w[:, k:k + 1] * pos[k:k + 1, :]
    pe_ref[...] = pe


# ---------------------------------------------------------------------------
# Kernel 2: lane-dense streaming add (HBM-bound):  out[b, n] = x[b, n] + pe[0, n]
# ---------------------------------------------------------------------------
def _add_pe_kernel(x_ref, pe_ref, o_ref):
    # x_ref: (TB, TL), pe_ref: (1, TL) -> broadcast over the sublane (row) axis.
    o_ref[...] = x_ref[...] + pe_ref[...]


def _largest_lane_tile(n, unit=128, max_elems=512 * 1024):
    """Largest multiple of `unit` dividing n and <= max_elems (else full n)."""
    if n % unit != 0 or n <= max_elems:
        return n
    best = unit
    t = unit
    while t <= max_elems:
        if n % t == 0:
            best = t
        t += unit
    return best


def _largest_row_tile(b, cap):
    """Full b if it fits, else the largest sublane-aligned divisor, else 1."""
    if b <= cap:
        return b
    best = 1
    d = 8
    while d <= cap:
        if b % d == 0:
            best = d
        d += 8
    return best


def positional_embedding_forward(x_nchw, pos_4hw, conv_w, conv_b, *, donate_x=False):
    """x_nchw: (B, C, W, H) float32.  Returns x + Conv1x1(pos) broadcast over batch."""
    B, C, W, H = x_nchw.shape
    S = W * H
    N = C * S

    pos2 = pos_4hw.reshape(4, S).astype(jnp.float32)
    w = conv_w.reshape(C, 4).astype(jnp.float32)       # (out_ch, in_ch, 1, 1) -> (out_ch, in_ch)
    b = conv_b.reshape(C, 1).astype(jnp.float32)

    # One-shot projection: whole (tiny) arrays in VMEM, grid=().
    pe = pl.pallas_call(
        _project_pos_kernel,
        out_shape=jax.ShapeDtypeStruct((C, S), jnp.float32),
    )(pos2, w, b)
    pe_row = pe.reshape(1, N)

    # Lane-dense streaming add over the flattened (B, C*S) view.
    x2 = x_nchw.reshape(B, N).astype(jnp.float32)

    TL = _largest_lane_tile(N)                          # lane tile, multiple of 128 when possible
    max_rows = max(1, (4 * 1024 * 1024) // (TL * 4))    # cap x block at ~4 MiB
    TB = _largest_row_tile(B, max_rows)
    grid = (B // TB, N // TL)

    out = pl.pallas_call(
        _add_pe_kernel,
        out_shape=jax.ShapeDtypeStruct((B, N), jnp.float32),
        grid_spec=pltpu.PrefetchScalarGridSpec(
            num_scalar_prefetch=0,
            grid=grid,
            in_specs=[
                pl.BlockSpec((TB, TL), lambda i, j: (i, j)),
                pl.BlockSpec((1, TL), lambda i, j: (0, j)),
            ],
            out_specs=pl.BlockSpec((TB, TL), lambda i, j: (i, j)),
        ),
        compiler_params=pltpu.CompilerParams(
            dimension_semantics=("parallel", "parallel")),
        input_output_aliases=({0: 0} if donate_x else {}),
    )(x2, pe_row)
    return out.reshape(B, C, W, H)


def build_linear_position_embedding(width: int, height: int):
    """Reproduces the buffer built in PositionalEmbedding.__init__: shape (4, width, height)."""
    east = jnp.tile(jnp.linspace(0.0, 1.0, height), width).reshape(width, height)
    west = jnp.tile(jnp.linspace(1.0, 0.0, height), width).reshape(width, height)
    south = jnp.tile(jnp.linspace(0.0, 1.0, width), height).reshape(height, width).T
    north = jnp.tile(jnp.linspace(1.0, 0.0, width), height).reshape(height, width).T
    return jnp.stack([north, south, west, east], axis=0).astype(jnp.float32)


if __name__ == "__main__":
    batch, channels, width, height = 2, 4, 16, 16

    key = jax.random.PRNGKey(0)
    k_x, k_w, k_b = jax.random.split(key, 3)

    # Deterministic parameter init (Conv2d(4, channels, kernel_size=1) shapes).
    fan_in = 4  # in_channels * 1 * 1
    bound = 1.0 / np.sqrt(fan_in)
    conv_w = jax.random.uniform(k_w, (channels, 4, 1, 1), jnp.float32, -bound, bound)
    conv_b = jax.random.uniform(k_b, (channels,), jnp.float32, -bound, bound)

    pos = build_linear_position_embedding(width, height)        # (4, W, H)
    x = jax.random.normal(k_x, (batch, channels, width, height), jnp.float32)

    out = positional_embedding_forward(x, pos, conv_w, conv_b)
    out = jax.block_until_ready(out)

    # Pure-JAX reference (einsum == 1x1 conv).
    pe_ref = jnp.einsum("ck,khw->chw", conv_w.reshape(channels, 4), pos) + conv_b[:, None, None]
    ref = x + pe_ref[None]
    assert np.allclose(np.asarray(out), np.asarray(ref), atol=1e-5, rtol=1e-5)

    print("KERNEL_OK")
</pallas_src>

<mosaic_0001>
module attributes {stable_mosaic.version = 11 : i64} {
  func.func @_project_pos_kernel(%arg0: memref<4x256xf32, #tpu.memory_space<vmem>>, %arg1: memref<4x4xf32, #tpu.memory_space<vmem>>, %arg2: memref<4x1xf32, #tpu.memory_space<vmem>>, %arg3: memref<4x256xf32, #tpu.memory_space<vmem>>) attributes {dimension_semantics = [], scalar_prefetch = 0 : i64, scratch_operands = 0 : i64, tpu.core_type = #tpu.core_type<tc>} {
    %c0 = arith.constant 0 : index
    %c0_0 = arith.constant 0 : index
    %0 = vector.load %arg0[%c0, %c0_0] : memref<4x256xf32, #tpu.memory_space<vmem>>, vector<4x256xf32>
    %c0_1 = arith.constant 0 : index
    %c0_2 = arith.constant 0 : index
    %1 = vector.load %arg1[%c0_1, %c0_2] : memref<4x4xf32, #tpu.memory_space<vmem>>, vector<4x4xf32>
    %c0_3 = arith.constant 0 : index
    %c0_4 = arith.constant 0 : index
    %2 = vector.load %arg2[%c0_3, %c0_4] : memref<4x1xf32, #tpu.memory_space<vmem>>, vector<4x1xf32>
    %3 = vector.extract_strided_slice %1 {offsets = [0, 0], sizes = [4, 1], strides = [1, 1]} : vector<4x4xf32> to vector<4x1xf32>
    %4 = vector.extract_strided_slice %0 {offsets = [0, 0], sizes = [1, 256], strides = [1, 1]} : vector<4x256xf32> to vector<1x256xf32>
    %5 = vector.broadcast %3 : vector<4x1xf32> to vector<4x256xf32>
    %6 = vector.broadcast %4 : vector<1x256xf32> to vector<4x256xf32>
    %7 = arith.mulf %5, %6 : vector<4x256xf32>
    %8 = vector.broadcast %2 : vector<4x1xf32> to vector<4x256xf32>
    %9 = arith.addf %8, %7 : vector<4x256xf32>
    %10 = vector.extract_strided_slice %1 {offsets = [0, 1], sizes = [4, 1], strides = [1, 1]} : vector<4x4xf32> to vector<4x1xf32>
    %11 = vector.extract_strided_slice %0 {offsets = [1, 0], sizes = [1, 256], strides = [1, 1]} : vector<4x256xf32> to vector<1x256xf32>
    %12 = vector.broadcast %10 : vector<4x1xf32> to vector<4x256xf32>
    %13 = vector.broadcast %11 : vector<1x256xf32> to vector<4x256xf32>
    %14 = arith.mulf %12, %13 : vector<4x256xf32>
    %15 = arith.addf %9, %14 : vector<4x256xf32>
    %16 = vector.extract_strided_slice %1 {offsets = [0, 2], sizes = [4, 1], strides = [1, 1]} : vector<4x4xf32> to vector<4x1xf32>
    %17 = vector.extract_strided_slice %0 {offsets = [2, 0], sizes = [1, 256], strides = [1, 1]} : vector<4x256xf32> to vector<1x256xf32>
    %18 = vector.broadcast %16 : vector<4x1xf32> to vector<4x256xf32>
    %19 = vector.broadcast %17 : vector<1x256xf32> to vector<4x256xf32>
    %20 = arith.mulf %18, %19 : vector<4x256xf32>
    %21 = arith.addf %15, %20 : vector<4x256xf32>
    %22 = vector.extract_strided_slice %1 {offsets = [0, 3], sizes = [4, 1], strides = [1, 1]} : vector<4x4xf32> to vector<4x1xf32>
    %23 = vector.extract_strided_slice %0 {offsets = [3, 0], sizes = [1, 256], strides = [1, 1]} : vector<4x256xf32> to vector<1x256xf32>
    %24 = vector.broadcast %22 : vector<4x1xf32> to vector<4x256xf32>
    %25 = vector.broadcast %23 : vector<1x256xf32> to vector<4x256xf32>
    %26 = arith.mulf %24, %25 : vector<4x256xf32>
    %27 = arith.addf %21, %26 : vector<4x256xf32>
    %c0_5 = arith.constant 0 : index
    %c0_6 = arith.constant 0 : index
    %28 = vector.load %arg3[%c0_5, %c0_6] : memref<4x256xf32, #tpu.memory_space<vmem>>, vector<4x256xf32>
    tpu.vector_store %arg3[%c0_5, %c0_6], %27 {strides = array<i32>} : memref<4x256xf32, #tpu.memory_space<vmem>>, vector<4x256xf32>,
    return
  }
}

</mosaic_0001>

<llo_original>
// kernel: tpu_custom_call.1
$region0: #{tpu_custom_call.1}
  #allocation0 [shape = 'u32[]', space=smem, size = 0x4, offset = 0x4, fixed_abs, tag = 'smem constant byte address 0x4 - core index']
  #allocation1 [shape = 'u32[144,128]{1,0:T(1,128)}', space=vmem, size = 0x12000, scoped, tag = 'internal scratch']
  %s0 = inlined_call_operand.hbm [shape: f32[4,256], index: 0, kind: input, shape index: {}]
  %s1 = inlined_call_operand.vmem [shape: f32[4,4], index: 1, kind: input, shape index: {}]
  %s2 = inlined_call_operand.vmem [shape: f32[4,1], index: 2, kind: input, shape index: {}]
  %s3 = inlined_call_operand.hbm [shape: f32[4,256], index: 3, kind: output, shape index: {}]
  %s4 = sld [smem:[#allocation0]]
  $region26: #{tpu_custom_call.1} parent=0
    _
  %s6 = ssub.s32 1, %s4
  %s7 = scalar_select 0, %s6, %s4
  $region1: #{tpu_custom_call.1} parent=0
    #allocation2 [shape = 'u8[4096]{0}', space=vmem, size = 0x1000, scoped, tag = 'input window, operand 0, single buffered']
    #allocation3 [shape = 's32[1]{0}', space=sflag, size = 0x4, scoped, tag = 'scoped memory for tpu_custom_call.1']
    #allocation4 [shape = 's32[1]{0}', space=sflag, size = 0x4, scoped, tag = 'scoped memory for tpu_custom_call.1']
    #allocation5 [shape = 'u8[4096]{0}', space=vmem, size = 0x1000, scoped, tag = 'output window, operand 0, single buffered']
    %8 = vsyncpa [#allocation3], 0
    %9 = vsyncpa [#allocation4], 0
    // Predicated region
    $region2: #{tpu_custom_call.1} parent=1 // pred_check
      _
    $region3: #{tpu_custom_call.1} parent=1 // pred_check_branch
      %11 = sbr.rel (0) target = $region5
    $region4: #{tpu_custom_call.1} parent=1 // pred_region
      %s13 = ssub.s32 128, 128
      %14 = vsyncadd [#allocation3], %s13
      %s16 = sshll.u32 [#allocation2], 4
      %s17 = int_to_ptr.vmem [resolvable:$true] %s16
      %19 = dma.hbm_to_vmem [thread:$0]  %s0, 128, %s17, [#allocation3]
    $region5: #{tpu_custom_call.1} parent=1 // pred_fallthru
      _
    // Predicated region
    $region6: #{tpu_custom_call.1} parent=1 // pred_check
      _
    $region7: #{tpu_custom_call.1} parent=1 // pred_check_branch
      %21 = sbr.rel (0) target = $region9
    $region8: #{tpu_custom_call.1} parent=1 // pred_region
      _
    $region9: #{tpu_custom_call.1} parent=1 // pred_fallthru
      _
    // Predicated region
    $region10: #{tpu_custom_call.1} parent=1 // pred_check
      _
    $region11: #{tpu_custom_call.1} parent=1 // pred_check_branch
      %23 = sbr.rel (0) target = $region13
    $region12: #{tpu_custom_call.1} parent=1 // pred_region
      _
    $region13: #{tpu_custom_call.1} parent=1 // pred_fallthru
      _
    // Predicated region
    $region14: #{tpu_custom_call.1} parent=1 // pred_check
      _
    $region15: #{tpu_custom_call.1} parent=1 // pred_check_branch
      %25 = sbr.rel (0) target = $region17
    $region16: #{tpu_custom_call.1} parent=1 // pred_region
      %26 = dma.done [#allocation3], 128
    $region17: #{tpu_custom_call.1} parent=1 // pred_fallthru
      _
    %v27 = vld [vmem:[#allocation2] sm:$0xff]
    %v28 = vld [vmem:[%s1] sm:$0xf]
    %v29 = vld [vmem:[%s2] sm:$0xf]
    %31 = vset.pattern.permute.xlu0 0
    %32 = vperm.xlu0 %31, %v28
    %v33 = vpop.permute.xlu0 %32
    %v36 = vlaneseq
    %v37 = vshrl.u32 %v36, 7
    %v38 = vsub.s32 0, %v37
    %v39 = vrot.slane %v27, %v38
    %v40 = vlaneseq
    %v41 = vshrl.u32 %v40, 7
    %v42 = vsub.s32 4, %v41
    %v43 = vrot.slane %v27, %v42
    %v46 = vlaneseq
    %v47 = vshrl.u32 %v46, 7
    %v48 = vsub.s32 0, %v47
    %v49 = vrot.slane %v39, %v48
    %v50 = vlaneseq
    %v51 = vshrl.u32 %v50, 7
    %v52 = vsub.s32 0, %v51
    %v53 = vrot.slane %v43, %v52
    %v54 = vmul.f32 %v33, %v49
    %v55 = vmul.f32 %v33, %v53
    %57 = vset.pattern.permute.xlu0 0
    %58 = vperm.xlu0 %57, %v29
    %v59 = vpop.permute.xlu0 %58
    %v61 = vadd.f32 %v59, %v54
    %v62 = vadd.f32 %v59, %v55
    %63 = vset.pattern.permute.xlu0 1
    %64 = vperm.xlu0 %63, %v28
    %v65 = vpop.permute.xlu0 %64
    %v67 = vlaneseq
    %v68 = vshrl.u32 %v67, 7
    %v69 = vsub.s32 1, %v68
    %v70 = vrot.slane %v27, %v69
    %v71 = vlaneseq
    %v72 = vshrl.u32 %v71, 7
    %v73 = vsub.s32 5, %v72
    %v74 = vrot.slane %v27, %v73
    %v77 = vlaneseq
    %v78 = vshrl.u32 %v77, 7
    %v79 = vsub.s32 1, %v78
    %v80 = vrot.slane %v70, %v79
    %v81 = vlaneseq
    %v82 = vshrl.u32 %v81, 7
    %v83 = vsub.s32 1, %v82
    %v84 = vrot.slane %v74, %v83
    %v85 = vmul.f32 %v65, %v80
    %v86 = vmul.f32 %v65, %v84
    %v87 = vadd.f32 %v61, %v85
    %v88 = vadd.f32 %v62, %v86
    %89 = vset.pattern.permute.xlu0 2
    %90 = vperm.xlu0 %89, %v28
    %v91 = vpop.permute.xlu0 %90
    %v93 = vlaneseq
    %v94 = vshrl.u32 %v93, 7
    %v95 = vsub.s32 2, %v94
    %v96 = vrot.slane %v27, %v95
    %v97 = vlaneseq
    %v98 = vshrl.u32 %v97, 7
    %v99 = vsub.s32 6, %v98
    %v100 = vrot.slane %v27, %v99
    %v103 = vlaneseq
    %v104 = vshrl.u32 %v103, 7
    %v105 = vsub.s32 2, %v104
    %v106 = vrot.slane %v96, %v105
    %v107 = vlaneseq
    %v108 = vshrl.u32 %v107, 7
    %v109 = vsub.s32 2, %v108
    %v110 = vrot.slane %v100, %v109
    %v111 = vmul.f32 %v91, %v106
    %v112 = vmul.f32 %v91, %v110
    %v113 = vadd.f32 %v87, %v111
    %v114 = vadd.f32 %v88, %v112
    %115 = vset.pattern.permute.xlu0 3
    %116 = vperm.xlu0 %115, %v28
    %v117 = vpop.permute.xlu0 %116
    %v119 = vlaneseq
    %v120 = vshrl.u32 %v119, 7
    %v121 = vsub.s32 3, %v120
    %v122 = vrot.slane %v27, %v121
    %v123 = vlaneseq
    %v124 = vshrl.u32 %v123, 7
    %v125 = vsub.s32 7, %v124
    %v126 = vrot.slane %v27, %v125
    %v129 = vlaneseq
    %v130 = vshrl.u32 %v129, 7
    %v131 = vsub.s32 3, %v130
    %v132 = vrot.slane %v122, %v131
    %v133 = vlaneseq
    %v134 = vshrl.u32 %v133, 7
    %v135 = vsub.s32 3, %v134
    %v136 = vrot.slane %v126, %v135
    %v137 = vmul.f32 %v117, %v132
    %v138 = vmul.f32 %v117, %v136
    %v139 = vadd.f32 %v113, %v137
    %v140 = vadd.f32 %v114, %v138
    %v143 = vcombine.low %v139, %v140
    %145 = vst [vmem:[#allocation5] sm:$0xff] %v143
    // Predicated region
    $region18: #{tpu_custom_call.1} parent=1 // pred_check
      _
    $region19: #{tpu_custom_call.1} parent=1 // pred_check_branch
      %147 = sbr.rel (0) target = $region21
    $region20: #{tpu_custom_call.1} parent=1 // pred_region
      %s149 = ssub.s32 128, 128
      %150 = vsyncadd [#allocation4], %s149
      %s152 = sshll.u32 [#allocation5], 4
      %s153 = int_to_ptr.vmem [resolvable:$true] %s152
      %155 = dma.vmem_to_hbm [thread:$0]  %s153, 128, %s3, [#allocation4]
    $region21: #{tpu_custom_call.1} parent=1 // pred_fallthru
      _
    // Predicated region
    $region22: #{tpu_custom_call.1} parent=1 // pred_check
      _
    $region23: #{tpu_custom_call.1} parent=1 // pred_check_branch
      %157 = sbr.rel (0) target = $region25
    $region24: #{tpu_custom_call.1} parent=1 // pred_region
      %158 = dma.done [#allocation4], 128
    $region25: #{tpu_custom_call.1} parent=1 // pred_fallthru
      _
    %159 = vsyncpa [#allocation3], 1
    %160 = vsyncpa [#allocation4], 1

</llo_original>
